<compile_context>
chip_gen: v7x
topology: tpu7x:2x2x1
jax: 0.10.0
libtpu: 0.0.40
codegen_flags: <defaults>
</compile_context>

<pallas_src>
import jax
import jax.numpy as jnp
from jax.experimental import pallas as pl
from jax.experimental.pallas import tpu as pltpu

N_PAD = 128            # lane-dense output width for linear3 (true q lives in lane 0)
MAX_BATCH_TILE = 512   # amortizes ~0.35us/grid-step overhead; fits VMEM on v5e/v6e/v7x


def _qnet_kernel(s_ref, a_ref, w1s_ref, w1a_ref, b1_ref, w2_ref, b2_ref,
                 w3_ref, b3_ref, o_ref):
    # linear1 on the (virtually) concatenated input, split into two MXU matmuls.
    h1 = (jnp.dot(s_ref[...], w1s_ref[...], preferred_element_type=jnp.float32)
          + jnp.dot(a_ref[...], w1a_ref[...], preferred_element_type=jnp.float32)
          + b1_ref[...])
    h1 = jnp.maximum(h1, 0.0)                                        # relu, f32

    h2 = jnp.dot(h1.astype(jnp.bfloat16), w2_ref[...],
                 preferred_element_type=jnp.float32) + b2_ref[...]
    h2 = jnp.maximum(h2, 0.0)                                        # relu, f32

    # linear3 padded to 128 output lanes -> unmasked lane-dense store; col 0 is q.
    q = jnp.dot(h2.astype(jnp.bfloat16), w3_ref[...],
                preferred_element_type=jnp.float32) + b3_ref[...]
    o_ref[...] = q


def soft_q_forward(state, action, params, *, max_batch_tile=MAX_BATCH_TILE):
    """state: (B, num_inputs) f32, action: (B, num_actions) f32 -> (B, 1) f32."""
    w1s, w1a, b1, w2, b2, w3p, b3p = params
    B, num_inputs = state.shape
    num_actions = action.shape[1]
    h0 = w1s.shape[1]
    h1d = w3p.shape[0]
    npad = w3p.shape[1]

    # bf16 matmul operands: halves activation DMA bytes, native MXU rate on v6e/v7x.
    s = state.astype(jnp.bfloat16)
    a = action.astype(jnp.bfloat16)

    tb = B if B <= max_batch_tile else max_batch_tile
    grid = (pl.cdiv(B, tb),)

    q_pad = pl.pallas_call(
        _qnet_kernel,
        out_shape=jax.ShapeDtypeStruct((B, npad), jnp.float32),
        grid=grid,
        in_specs=[
            pl.BlockSpec((tb, num_inputs), lambda i: (i, 0)),      # state tile
            pl.BlockSpec((tb, num_actions), lambda i: (i, 0)),     # action tile
            pl.BlockSpec((num_inputs, h0), lambda i: (0, 0)),      # W1_s (resident)
            pl.BlockSpec((num_actions, h0), lambda i: (0, 0)),     # W1_a (resident)
            pl.BlockSpec((1, h0), lambda i: (0, 0)),               # b1
            pl.BlockSpec((h0, h0), lambda i: (0, 0)),              # W2
            pl.BlockSpec((1, h0), lambda i: (0, 0)),               # b2
            pl.BlockSpec((h1d, npad), lambda i: (0, 0)),           # W3 (padded)
            pl.BlockSpec((1, npad), lambda i: (0, 0)),             # b3 (padded)
        ],
        out_specs=pl.BlockSpec((tb, npad), lambda i: (i, 0)),
        compiler_params=pltpu.CompilerParams(
            dimension_semantics=("parallel",)),
    )(s, a, w1s, w1a, b1, w2, b2, w3p, b3p)
    return q_pad[:, :1]


def init_params(key, num_inputs, num_actions, hidden_size, init_w=0.003,
                n_pad=N_PAD):
    """Mirrors PyTorch defaults: linear1/linear2 uniform(+-1/sqrt(fan_in)),
    linear3 uniform(-init_w, init_w). Note the PyTorch module builds
    linear2 = Linear(h0, h0) but linear3 = Linear(h1, 1), so its forward only
    works when hidden_size[0] == hidden_size[1]; we enforce that explicitly.
    Returns (packed_kernel_params, f32_reference_params)."""
    h0, h1 = hidden_size[0], hidden_size[1]
    assert h0 == h1, "SoftQNetworkSAC.forward requires hidden_size[0] == hidden_size[1]"
    d_in = num_inputs + num_actions
    k = jax.random.split(key, 6)

    def lin_init(kw, kb, fan_in, fan_out):
        bound = 1.0 / float(fan_in) ** 0.5
        w = jax.random.uniform(kw, (fan_in, fan_out), jnp.float32, -bound, bound)
        b = jax.random.uniform(kb, (1, fan_out), jnp.float32, -bound, bound)
        return w, b

    w1, b1 = lin_init(k[0], k[1], d_in, h0)
    w2, b2 = lin_init(k[2], k[3], h0, h0)
    w3 = jax.random.uniform(k[4], (h1, 1), jnp.float32, -init_w, init_w)
    b3 = jax.random.uniform(k[5], (1, 1), jnp.float32, -init_w, init_w)

    # --- pack for the kernel ---
    # split W1 along the input axis (fuses the concat), bf16 matmul operands,
    # zero-pad linear3 to n_pad output lanes for a lane-dense store.
    w1s = w1[:num_inputs].astype(jnp.bfloat16)
    w1a = w1[num_inputs:].astype(jnp.bfloat16)
    w2k = w2.astype(jnp.bfloat16)
    w3p = jnp.pad(w3, ((0, 0), (0, n_pad - 1))).astype(jnp.bfloat16)
    b3p = jnp.pad(b3, ((0, 0), (0, n_pad - 1)))                     # f32
    packed = (w1s, w1a, b1, w2k, b2, w3p, b3p)
    ref_params = (w1, b1, w2, b2, w3, b3)
    return packed, ref_params


if __name__ == "__main__":
    key = jax.random.PRNGKey(0)
    num_inputs, num_actions = 12, 4
    hidden_size = [32, 32]
    B = 8

    kp, ks, ka = jax.random.split(key, 3)
    packed, ref_p = init_params(kp, num_inputs, num_actions, hidden_size)
    state = jax.random.normal(ks, (B, num_inputs), jnp.float32)
    action = jax.random.normal(ka, (B, num_actions), jnp.float32)

    q = soft_q_forward(state, action, packed)
    q = jax.block_until_ready(q)

    # plain-JAX f32 reference (kernel uses bf16 MXU operands with f32 accumulate,
    # so compare with a modest tolerance)
    w1, b1, w2, b2, w3, b3 = ref_p
    x = jnp.concatenate([state, action], axis=1)
    ref = jnp.maximum(x @ w1 + b1, 0.0)
    ref = jnp.maximum(ref @ w2 + b2, 0.0)
    ref = ref @ w3 + b3

    assert q.shape == (B, 1)
    err = float(jnp.max(jnp.abs(q - ref)))
    assert jnp.allclose(q, ref, atol=5e-3, rtol=5e-2), f"mismatch vs reference (max abs diff {err})"
    print("KERNEL_OK")
</pallas_src>

<mosaic_0001>
module attributes {stable_mosaic.version = 11 : i64} {
  func.func @_qnet_kernel(%arg0: i32, %arg1: memref<8x12xbf16, #tpu.memory_space<vmem>>, %arg2: memref<8x4xbf16, #tpu.memory_space<vmem>>, %arg3: memref<12x32xbf16, #tpu.memory_space<vmem>>, %arg4: memref<4x32xbf16, #tpu.memory_space<vmem>>, %arg5: memref<1x32xf32, #tpu.memory_space<vmem>>, %arg6: memref<32x32xbf16, #tpu.memory_space<vmem>>, %arg7: memref<1x32xf32, #tpu.memory_space<vmem>>, %arg8: memref<32x128xbf16, #tpu.memory_space<vmem>>, %arg9: memref<1x128xf32, #tpu.memory_space<vmem>>, %arg10: memref<8x128xf32, #tpu.memory_space<vmem>>) attributes {dimension_semantics = [#tpu.dimension_semantics<parallel>], iteration_bounds = array<i64: 1>, scalar_prefetch = 0 : i64, scratch_operands = 0 : i64, tpu.core_type = #tpu.core_type<tc>, window_params = [{transform_indices = @transform_0, window_bounds = array<i64: 8, 12>}, {transform_indices = @transform_1, window_bounds = array<i64: 8, 4>}, {pipeline_mode = #tpu.pipeline_mode<synchronous>, transform_indices = @transform_2, window_bounds = array<i64: 12, 32>}, {pipeline_mode = #tpu.pipeline_mode<synchronous>, transform_indices = @transform_3, window_bounds = array<i64: 4, 32>}, {pipeline_mode = #tpu.pipeline_mode<synchronous>, transform_indices = @transform_4, window_bounds = array<i64: 1, 32>}, {pipeline_mode = #tpu.pipeline_mode<synchronous>, transform_indices = @transform_5, window_bounds = array<i64: 32, 32>}, {pipeline_mode = #tpu.pipeline_mode<synchronous>, transform_indices = @transform_6, window_bounds = array<i64: 1, 32>}, {pipeline_mode = #tpu.pipeline_mode<synchronous>, transform_indices = @transform_7, window_bounds = array<i64: 32, 128>}, {pipeline_mode = #tpu.pipeline_mode<synchronous>, transform_indices = @transform_8, window_bounds = array<i64: 1, 128>}, {transform_indices = @transform_9, window_bounds = array<i64: 8, 128>}]} {
    %c0 = arith.constant 0 : index
    %c0_0 = arith.constant 0 : index
    %0 = vector.load %arg1[%c0, %c0_0] : memref<8x12xbf16, #tpu.memory_space<vmem>>, vector<8x12xbf16>
    %c0_1 = arith.constant 0 : index
    %c0_2 = arith.constant 0 : index
    %1 = vector.load %arg3[%c0_1, %c0_2] : memref<12x32xbf16, #tpu.memory_space<vmem>>, vector<12x32xbf16>
    %cst = arith.constant dense<0.000000e+00> : vector<8x32xf32>
    %2 = tpu.matmul %0, %1, %cst {dimension_numbers = #tpu.dot_dimension_numbers<[1], [0], [0], [1], [0, 0, 1, 1], [], []>} : vector<8x12xbf16>, vector<12x32xbf16>, vector<8x32xf32> -> vector<8x32xf32>
    %c0_3 = arith.constant 0 : index
    %c0_4 = arith.constant 0 : index
    %3 = vector.load %arg2[%c0_3, %c0_4] : memref<8x4xbf16, #tpu.memory_space<vmem>>, vector<8x4xbf16>
    %c0_5 = arith.constant 0 : index
    %c0_6 = arith.constant 0 : index
    %4 = vector.load %arg4[%c0_5, %c0_6] : memref<4x32xbf16, #tpu.memory_space<vmem>>, vector<4x32xbf16>
    %cst_7 = arith.constant dense<0.000000e+00> : vector<8x32xf32>
    %5 = tpu.matmul %3, %4, %cst_7 {dimension_numbers = #tpu.dot_dimension_numbers<[1], [0], [0], [1], [0, 0, 1, 1], [], []>} : vector<8x4xbf16>, vector<4x32xbf16>, vector<8x32xf32> -> vector<8x32xf32>
    %6 = arith.addf %2, %5 : vector<8x32xf32>
    %c0_8 = arith.constant 0 : index
    %c0_9 = arith.constant 0 : index
    %7 = vector.load %arg5[%c0_8, %c0_9] : memref<1x32xf32, #tpu.memory_space<vmem>>, vector<1x32xf32>
    %8 = vector.broadcast %7 : vector<1x32xf32> to vector<8x32xf32>
    %9 = arith.addf %6, %8 : vector<8x32xf32>
    %cst_10 = arith.constant 0.000000e+00 : f32
    %10 = vector.broadcast %cst_10 : f32 to vector<8x32xf32>
    %11 = arith.maximumf %9, %10 : vector<8x32xf32>
    %12 = arith.truncf %11 : vector<8x32xf32> to vector<8x32xbf16>
    %c0_11 = arith.constant 0 : index
    %c0_12 = arith.constant 0 : index
    %13 = vector.load %arg6[%c0_11, %c0_12] : memref<32x32xbf16, #tpu.memory_space<vmem>>, vector<32x32xbf16>
    %cst_13 = arith.constant dense<0.000000e+00> : vector<8x32xf32>
    %14 = tpu.matmul %12, %13, %cst_13 {dimension_numbers = #tpu.dot_dimension_numbers<[1], [0], [0], [1], [0, 0, 1, 1], [], []>} : vector<8x32xbf16>, vector<32x32xbf16>, vector<8x32xf32> -> vector<8x32xf32>
    %c0_14 = arith.constant 0 : index
    %c0_15 = arith.constant 0 : index
    %15 = vector.load %arg7[%c0_14, %c0_15] : memref<1x32xf32, #tpu.memory_space<vmem>>, vector<1x32xf32>
    %16 = vector.broadcast %15 : vector<1x32xf32> to vector<8x32xf32>
    %17 = arith.addf %14, %16 : vector<8x32xf32>
    %cst_16 = arith.constant 0.000000e+00 : f32
    %18 = vector.broadcast %cst_16 : f32 to vector<8x32xf32>
    %19 = arith.maximumf %17, %18 : vector<8x32xf32>
    %20 = arith.truncf %19 : vector<8x32xf32> to vector<8x32xbf16>
    %c0_17 = arith.constant 0 : index
    %c0_18 = arith.constant 0 : index
    %21 = vector.load %arg8[%c0_17, %c0_18] : memref<32x128xbf16, #tpu.memory_space<vmem>>, vector<32x128xbf16>
    %cst_19 = arith.constant dense<0.000000e+00> : vector<8x128xf32>
    %22 = tpu.matmul %20, %21, %cst_19 {dimension_numbers = #tpu.dot_dimension_numbers<[1], [0], [0], [1], [0, 0, 1, 1], [], []>} : vector<8x32xbf16>, vector<32x128xbf16>, vector<8x128xf32> -> vector<8x128xf32>
    %c0_20 = arith.constant 0 : index
    %c0_21 = arith.constant 0 : index
    %23 = vector.load %arg9[%c0_20, %c0_21] : memref<1x128xf32, #tpu.memory_space<vmem>>, vector<1x128xf32>
    %24 = vector.broadcast %23 : vector<1x128xf32> to vector<8x128xf32>
    %25 = arith.addf %22, %24 : vector<8x128xf32>
    %c0_22 = arith.constant 0 : index
    %c0_23 = arith.constant 0 : index
    %26 = vector.load %arg10[%c0_22, %c0_23] : memref<8x128xf32, #tpu.memory_space<vmem>>, vector<8x128xf32>
    tpu.vector_store %arg10[%c0_22, %c0_23], %25 {strides = array<i32>} : memref<8x128xf32, #tpu.memory_space<vmem>>, vector<8x128xf32>,
    return
  }
  func.func @transform_0(%arg0: i32) -> (i32, i32) {
    %c0_i32 = arith.constant 0 : i32
    %c0_i32_0 = arith.constant 0 : i32
    return %arg0, %c0_i32 : i32, i32
  }
  func.func @transform_1(%arg0: i32) -> (i32, i32) {
    %c0_i32 = arith.constant 0 : i32
    %c0_i32_0 = arith.constant 0 : i32
    return %arg0, %c0_i32 : i32, i32
  }
  func.func @transform_2(%arg0: i32) -> (i32, i32) {
    %c0_i32 = arith.constant 0 : i32
    %c0_i32_0 = arith.constant 0 : i32
    %c0_i32_1 = arith.constant 0 : i32
    return %c0_i32, %c0_i32_0 : i32, i32
  }
  func.func @transform_3(%arg0: i32) -> (i32, i32) {
    %c0_i32 = arith.constant 0 : i32
    %c0_i32_0 = arith.constant 0 : i32
    %c0_i32_1 = arith.constant 0 : i32
    return %c0_i32, %c0_i32_0 : i32, i32
  }
  func.func @transform_4(%arg0: i32) -> (i32, i32) {
    %c0_i32 = arith.constant 0 : i32
    %c0_i32_0 = arith.constant 0 : i32
    %c0_i32_1 = arith.constant 0 : i32
    return %c0_i32, %c0_i32_0 : i32, i32
  }
  func.func @transform_5(%arg0: i32) -> (i32, i32) {
    %c0_i32 = arith.constant 0 : i32
    %c0_i32_0 = arith.constant 0 : i32
    %c0_i32_1 = arith.constant 0 : i32
    return %c0_i32, %c0_i32_0 : i32, i32
  }
  func.func @transform_6(%arg0: i32) -> (i32, i32) {
    %c0_i32 = arith.constant 0 : i32
    %c0_i32_0 = arith.constant 0 : i32
    %c0_i32_1 = arith.constant 0 : i32
    return %c0_i32, %c0_i32_0 : i32, i32
  }
  func.func @transform_7(%arg0: i32) -> (i32, i32) {
    %c0_i32 = arith.constant 0 : i32
    %c0_i32_0 = arith.constant 0 : i32
    %c0_i32_1 = arith.constant 0 : i32
    return %c0_i32, %c0_i32_0 : i32, i32
  }
  func.func @transform_8(%arg0: i32) -> (i32, i32) {
    %c0_i32 = arith.constant 0 : i32
    %c0_i32_0 = arith.constant 0 : i32
    %c0_i32_1 = arith.constant 0 : i32
    return %c0_i32, %c0_i32_0 : i32, i32
  }
  func.func @transform_9(%arg0: i32) -> (i32, i32) {
    %c0_i32 = arith.constant 0 : i32
    %c0_i32_0 = arith.constant 0 : i32
    return %arg0, %c0_i32 : i32, i32
  }
}

</mosaic_0001>

<llo_original>
// kernel: tpu_custom_call.1
$region0: #{tpu_custom_call.1}
  #allocation0 [shape = 'u32[]', space=smem, size = 0x4, offset = 0x4, fixed_abs, tag = 'smem constant byte address 0x4 - core index']
  #allocation1 [shape = 'u32[144,128]{1,0:T(1,128)}', space=vmem, size = 0x12000, scoped, tag = 'internal scratch']
  %s0 = inlined_call_operand.hbm [shape: bf16[8,12], index: 0, kind: input, shape index: {}]
  %s1 = inlined_call_operand.vmem [shape: bf16[8,4], index: 1, kind: input, shape index: {}]
  %s2 = inlined_call_operand.hbm [shape: bf16[12,32], index: 2, kind: input, shape index: {}]
  %s3 = inlined_call_operand.hbm [shape: bf16[4,32], index: 3, kind: input, shape index: {}]
  %s4 = inlined_call_operand.hbm [shape: f32[1,32], index: 4, kind: input, shape index: {}]
  %s5 = inlined_call_operand.vmem [shape: bf16[32,32], index: 5, kind: input, shape index: {}]
  %s6 = inlined_call_operand.hbm [shape: f32[1,32], index: 6, kind: input, shape index: {}]
  %s7 = inlined_call_operand.vmem [shape: bf16[32,128], index: 7, kind: input, shape index: {}]
  %s8 = inlined_call_operand.vmem [shape: f32[1,128], index: 8, kind: input, shape index: {}]
  %s9 = inlined_call_operand.hbm [shape: f32[8,128], index: 9, kind: output, shape index: {}]
  %s10 = sld [smem:[#allocation0]]
  $region66: #{tpu_custom_call.1} parent=0
    _
  %s12 = ssub.s32 1, %s10
  %s13 = scalar_select 0, %s12, %s10
  $region1: #{tpu_custom_call.1} parent=0
    #allocation2 [shape = 'u8[2048]{0}', space=vmem, size = 0x800, scoped, tag = 'input window, operand 0, single buffered']
    #allocation3 [shape = 's32[1]{0}', space=sflag, size = 0x4, scoped, tag = 'scoped memory for tpu_custom_call.1']
    #allocation4 [shape = 's32[1]{0}', space=sflag, size = 0x4, scoped, tag = 'scoped memory for tpu_custom_call.1']
    #allocation5 [shape = 'u8[4096]{0}', space=vmem, size = 0x1000, scoped, tag = 'input window, operand 2, single buffered']
    #allocation6 [shape = 's32[1]{0}', space=sflag, size = 0x4, scoped, tag = 'scoped memory for tpu_custom_call.1']
    #allocation7 [shape = 'u8[1024]{0}', space=vmem, size = 0x400, scoped, tag = 'input window, operand 3, single buffered']
    #allocation8 [shape = 'u8[512]{0}', space=vmem, size = 0x400, scoped, tag = 'input window, operand 4, single buffered']
    #allocation9 [shape = 's32[1]{0}', space=sflag, size = 0x4, scoped, tag = 'scoped memory for tpu_custom_call.1']
    #allocation10 [shape = 'u8[512]{0}', space=vmem, size = 0x400, scoped, tag = 'input window, operand 6, single buffered']
    #allocation11 [shape = 'u8[4096]{0}', space=vmem, size = 0x1000, scoped, tag = 'output window, operand 0, single buffered']
    %14 = vsyncpa [#allocation3], 0
    %15 = vsyncpa [#allocation6], 0
    %16 = vsyncpa [#allocation9], 0
    %17 = vsyncpa [#allocation4], 0
    // Predicated region
    $region2: #{tpu_custom_call.1} parent=1 // pred_check
      _
    $region3: #{tpu_custom_call.1} parent=1 // pred_check_branch
      %19 = sbr.rel (0) target = $region5
    $region4: #{tpu_custom_call.1} parent=1 // pred_region
      %s21 = ssub.s32 64, 64
      %22 = vsyncadd [#allocation3], %s21
      %s24 = sshll.u32 [#allocation2], 4
      %s25 = int_to_ptr.vmem [resolvable:$true] %s24
      %27 = dma.hbm_to_vmem [thread:$0]  %s0, 64, %s25, [#allocation3]
    $region5: #{tpu_custom_call.1} parent=1 // pred_fallthru
      _
    // Predicated region
    $region6: #{tpu_custom_call.1} parent=1 // pred_check
      _
    $region7: #{tpu_custom_call.1} parent=1 // pred_check_branch
      %29 = sbr.rel (0) target = $region9
    $region8: #{tpu_custom_call.1} parent=1 // pred_region
      _
    $region9: #{tpu_custom_call.1} parent=1 // pred_fallthru
      _
    // Predicated region
    $region10: #{tpu_custom_call.1} parent=1 // pred_check
      _
    $region11: #{tpu_custom_call.1} parent=1 // pred_check_branch
      %31 = sbr.rel (0) target = $region13
    $region12: #{tpu_custom_call.1} parent=1 // pred_region
      %s33 = ssub.s32 128, 128
      %34 = vsyncadd [#allocation6], %s33
      %s35 = sshll.u32 [#allocation5], 4
      %s36 = int_to_ptr.vmem [resolvable:$true] %s35
      %41 = dma.hbm_to_vmem [thread:$0]  %s2, 128, %s36, [#allocation6], 64, 64, 4
    $region13: #{tpu_custom_call.1} parent=1 // pred_fallthru
      _
    // Predicated region
    $region14: #{tpu_custom_call.1} parent=1 // pred_check
      _
    $region15: #{tpu_custom_call.1} parent=1 // pred_check_branch
      %43 = sbr.rel (0) target = $region17
    $region16: #{tpu_custom_call.1} parent=1 // pred_region
      %s45 = ssub.s32 32, 32
      %46 = vsyncadd [#allocation6], %s45
      %s48 = sshll.u32 [#allocation7], 4
      %s49 = int_to_ptr.vmem [resolvable:$true] %s48
      %51 = dma.hbm_to_vmem [thread:$0]  %s3, 32, %s49, [#allocation6]
    $region17: #{tpu_custom_call.1} parent=1 // pred_fallthru
      _
    // Predicated region
    $region18: #{tpu_custom_call.1} parent=1 // pred_check
      _
    $region19: #{tpu_custom_call.1} parent=1 // pred_check_branch
      %53 = sbr.rel (0) target = $region21
    $region20: #{tpu_custom_call.1} parent=1 // pred_region
      %s55 = ssub.s32 16, 16
      %56 = vsyncadd [#allocation9], %s55
      %s58 = sshll.u32 [#allocation8], 4
      %s59 = int_to_ptr.vmem [resolvable:$true] %s58
      %61 = dma.hbm_to_vmem [thread:$0]  %s4, 16, %s59, [#allocation9]
    $region21: #{tpu_custom_call.1} parent=1 // pred_fallthru
      _
    // Predicated region
    $region22: #{tpu_custom_call.1} parent=1 // pred_check
      _
    $region23: #{tpu_custom_call.1} parent=1 // pred_check_branch
      %63 = sbr.rel (0) target = $region25
    $region24: #{tpu_custom_call.1} parent=1 // pred_region
      _
    $region25: #{tpu_custom_call.1} parent=1 // pred_fallthru
      _
    // Predicated region
    $region26: #{tpu_custom_call.1} parent=1 // pred_check
      _
    $region27: #{tpu_custom_call.1} parent=1 // pred_check_branch
      %65 = sbr.rel (0) target = $region29
    $region28: #{tpu_custom_call.1} parent=1 // pred_region
      %s67 = ssub.s32 16, 16
      %68 = vsyncadd [#allocation9], %s67
      %s70 = sshll.u32 [#allocation10], 4
      %s71 = int_to_ptr.vmem [resolvable:$true] %s70
      %73 = dma.hbm_to_vmem [thread:$0]  %s6, 16, %s71, [#allocation9]
    $region29: #{tpu_custom_call.1} parent=1 // pred_fallthru
      _
    // Predicated region
    $region30: #{tpu_custom_call.1} parent=1 // pred_check
      _
    $region31: #{tpu_custom_call.1} parent=1 // pred_check_branch
      %75 = sbr.rel (0) target = $region33
    $region32: #{tpu_custom_call.1} parent=1 // pred_region
      _
    $region33: #{tpu_custom_call.1} parent=1 // pred_fallthru
      _
    // Predicated region
    $region34: #{tpu_custom_call.1} parent=1 // pred_check
      _
    $region35: #{tpu_custom_call.1} parent=1 // pred_check_branch
      %77 = sbr.rel (0) target = $region37
    $region36: #{tpu_custom_call.1} parent=1 // pred_region
      _
    $region37: #{tpu_custom_call.1} parent=1 // pred_fallthru
      _
    // Predicated region
    $region38: #{tpu_custom_call.1} parent=1 // pred_check
      _
    $region39: #{tpu_custom_call.1} parent=1 // pred_check_branch
      %79 = sbr.rel (0) target = $region41
    $region40: #{tpu_custom_call.1} parent=1 // pred_region
      %80 = dma.done [#allocation3], 64
    $region41: #{tpu_custom_call.1} parent=1 // pred_fallthru
      _
    // Predicated region
    $region42: #{tpu_custom_call.1} parent=1 // pred_check
      _
    $region43: #{tpu_custom_call.1} parent=1 // pred_check_branch
      %82 = sbr.rel (0) target = $region45
    $region44: #{tpu_custom_call.1} parent=1 // pred_region
      %83 = dma.done [#allocation6], 128
    $region45: #{tpu_custom_call.1} parent=1 // pred_fallthru
      _
    // Predicated region
    $region46: #{tpu_custom_call.1} parent=1 // pred_check
      _
    $region47: #{tpu_custom_call.1} parent=1 // pred_check_branch
      %85 = sbr.rel (0) target = $region49
    $region48: #{tpu_custom_call.1} parent=1 // pred_region
      %86 = dma.done [#allocation6], 32
    $region49: #{tpu_custom_call.1} parent=1 // pred_fallthru
      _
    // Predicated region
    $region50: #{tpu_custom_call.1} parent=1 // pred_check
      _
    $region51: #{tpu_custom_call.1} parent=1 // pred_check_branch
      %88 = sbr.rel (0) target = $region53
    $region52: #{tpu_custom_call.1} parent=1 // pred_region
      %89 = dma.done [#allocation9], 16
    $region53: #{tpu_custom_call.1} parent=1 // pred_fallthru
      _
    // Predicated region
    $region54: #{tpu_custom_call.1} parent=1 // pred_check
      _
    $region55: #{tpu_custom_call.1} parent=1 // pred_check_branch
      %91 = sbr.rel (0) target = $region57
    $region56: #{tpu_custom_call.1} parent=1 // pred_region
      %92 = dma.done [#allocation9], 16
    $region57: #{tpu_custom_call.1} parent=1 // pred_fallthru
      _
    %v94 = vld [vmem:[#allocation2] sm:$0xf]
    %v95 = vld [vmem:[#allocation5] sm:$0xf]
    %v96 = vld [vmem:[#allocation5 + $0x4] sm:$0x3]
    %v97 = vld [vmem:[%s1] sm:$0xf]
    %v98 = vld [vmem:[#allocation7] sm:$0x3]
    %vm99 = vcmask 31744
    %v101 = vsel %vm99, %v97, 0
    %vm103 = vcmask 1041408
    %v105 = vsel %vm103, %v98, 0
    %107 = vmatprep.subr.bf16.mxu0 0
    %108 = vmatpush1.bf16.msra.mxu0 %v105
    %109 = vmatprep.subr.bf16.mxu0 0
    %110 = vmatpush1.bf16.msra.mxu0 0
    %111 = vmatprep.subr.bf16.mxu0 0
    %112 = vmatpush1.bf16.msra.mxu0 0
    %113 = vmatprep.subr.bf16.mxu0 0
    %114 = vmatpush1.bf16.msra.mxu0 0
    %115 = vmatprep.subr.bf16.mxu0 0
    %116 = vmatpush1.bf16.msra.mxu0 0
    %117 = vmatprep.subr.bf16.mxu0 0
    %118 = vmatpush1.bf16.msra.mxu0 0
    %119 = vmatprep.subr.bf16.mxu0 0
    %120 = vmatpush1.bf16.msra.mxu0 0
    %121 = vmatprep.subr.bf16.mxu0 0
    %122 = vmatpush1.bf16.msra.mxu0 0
    %123 = vmatprep.subr.bf16.mxu0 0
    %124 = vmatpush1.bf16.msra.mxu0 0
    %125 = vmatprep.subr.bf16.mxu0 0
    %126 = vmatpush1.bf16.msra.mxu0 0
    %127 = vmatprep.subr.bf16.mxu0 0
    %128 = vmatpush1.bf16.msra.mxu0 0
    %129 = vmatprep.subr.bf16.mxu0 0
    %130 = vmatpush1.bf16.msra.mxu0 0
    %131 = vmatprep.subr.bf16.mxu0 0
    %132 = vmatpush1.bf16.msra.mxu0 0
    %133 = vmatprep.subr.bf16.mxu0 0
    %134 = vmatpush1.bf16.msra.mxu0 0
    %135 = vmatprep.subr.bf16.mxu0 0
    %136 = vmatpush1.bf16.msra.mxu0 0
    %137 = vmatprep.subr.bf16.mxu0 0
    %138 = vmatpush1.bf16.msra.mxu0 0
    %139 = vmatprep.mubr.bf16.mxu0 0
    %140 = vmatmul.mubr.bf16.gmra.mrb[0].mxu0 %v101
    %v141 = vpop.f32.mrb[0].mxu0
    %v142 = vadd.f32 0.0, %v141
    %v143 = vpop.f32.mrb[0].mxu0
    %v144 = vpop.f32.mrb[0].mxu0
    %v145 = vpop.f32.mrb[0].mxu0
    %146 = vdwg.mxu0
    %v149 = vunpack.c.l.b16 %v95
    %v150 = vunpack.c.l.b16 %v96
    %v151 = vpack.c.b16 %v150, %v149
    %vm152 = vcmask 97280
    %v154 = vsel %vm152, %v94, 0
    %vm156 = vcmask 1045504
    %v158 = vsel %vm156, %v151, 0
    %160 = vmatprep.subr.bf16.mxu0 0
    %161 = vmatpush1.bf16.msra.mxu0 %v158
    %162 = vmatprep.subr.bf16.mxu0 0
    %163 = vmatpush1.bf16.msra.mxu0 0
    %164 = vmatprep.subr.bf16.mxu0 0
    %165 = vmatpush1.bf16.msra.mxu0 0
    %166 = vmatprep.subr.bf16.mxu0 0
    %167 = vmatpush1.bf16.msra.mxu0 0
    %168 = vmatprep.subr.bf16.mxu0 0
    %169 = vmatpush1.bf16.msra.mxu0 0
    %170 = vmatprep.subr.bf16.mxu0 0
    %171 = vmatpush1.bf16.msra.mxu0 0
    %172 = vmatprep.subr.bf16.mxu0 0
    %173 = vmatpush1.bf16.msra.mxu0 0
    %174 = vmatprep.subr.bf16.mxu0 0
    %175 = vmatpush1.bf16.msra.mxu0 0
    %176 = vmatprep.subr.bf16.mxu0 0
    %177 = vmatpush1.bf16.msra.mxu0 0
    %178 = vmatprep.subr.bf16.mxu0 0
    %179 = vmatpush1.bf16.msra.mxu0 0
    %180 = vmatprep.subr.bf16.mxu0 0
    %181 = vmatpush1.bf16.msra.mxu0 0
    %182 = vmatprep.subr.bf16.mxu0 0
    %183 = vmatpush1.bf16.msra.mxu0 0
    %184 = vmatprep.subr.bf16.mxu0 0
    %185 = vmatpush1.bf16.msra.mxu0 0
    %186 = vmatprep.subr.bf16.mxu0 0
    %187 = vmatpush1.bf16.msra.mxu0 0
    %188 = vmatprep.subr.bf16.mxu0 0
    %189 = vmatpush1.bf16.msra.mxu0 0
    %190 = vmatprep.subr.bf16.mxu0 0
    %191 = vmatpush1.bf16.msra.mxu0 0
    %192 = vmatprep.mubr.bf16.mxu0 0
    %193 = vmatmul.mubr.bf16.gmra.mrb[0].mxu0 %v154
    %v194 = vpop.f32.mrb[0].mxu0
    %v195 = vadd.f32 %v142, %v194
    %v196 = vpop.f32.mrb[0].mxu0
    %v197 = vpop.f32.mrb[0].mxu0
    %v198 = vpop.f32.mrb[0].mxu0
    %199 = vdwg.mxu0
    %v200 = vld [vmem:[#allocation8] sm:$0x1]
    %v202 = vlaneseq
    %v203 = vshrl.u32 %v202, 7
    %v204 = vsub.s32 0, %v203
    %v205 = vrot.slane %v200, %v204
    %v207 = vadd.f32 %v195, %v205
    %v208 = vmax.f32 %v207, 0.0
    %v209 = vpack.c.bf16 %v208, %v208
    %v210 = vld [vmem:[%s5] sm:$0xf]
    %v211 = vld [vmem:[%s5 + $0x4] sm:$0xf]
    %v212 = vld [vmem:[%s5 + $0x8] sm:$0xf]
    %v213 = vld [vmem:[%s5 + $0xc] sm:$0xf]
    %v214 = vld [vmem:[#allocation10] sm:$0x1]
    %v216 = vlaneseq
    %v217 = vshrl.u32 %v216, 7
    %v218 = vsub.s32 0, %v217
    %v219 = vrot.slane %v214, %v218
    %v225 = vunpack.c.l.b16 %v210
    %v226 = vunpack.c.l.b16 %v211
    %v227 = vunpack.c.l.b16 %v212
    %v228 = vunpack.c.l.b16 %v213
    %v229 = vpack.c.b16 %v226, %v225
    %v230 = vpack.c.b16 %v228, %v227
    %vm233 = vcmask 261120
    %v235 = vsel %vm233, %v209, 0
    %237 = vmatprep.subr.bf16.mxu0 0
    %238 = vmatpush1.bf16.msra.mxu0 %v229
    %239 = vmatprep.subr.bf16.mxu0 0
    %240 = vmatpush1.bf16.msra.mxu0 %v230
    %241 = vmatprep.subr.bf16.mxu0 0
    %242 = vmatpush1.bf16.msra.mxu0 0
    %243 = vmatprep.subr.bf16.mxu0 0
    %244 = vmatpush1.bf16.msra.mxu0 0
    %245 = vmatprep.subr.bf16.mxu0 0
    %246 = vmatpush1.bf16.msra.mxu0 0
    %247 = vmatprep.subr.bf16.mxu0 0
    %248 = vmatpush1.bf16.msra.mxu0 0
    %249 = vmatprep.subr.bf16.mxu0 0
    %250 = vmatpush1.bf16.msra.mxu0 0
    %251 = vmatprep.subr.bf16.mxu0 0
    %252 = vmatpush1.bf16.msra.mxu0 0
    %253 = vmatprep.subr.bf16.mxu0 0
    %254 = vmatpush1.bf16.msra.mxu0 0
    %255 = vmatprep.subr.bf16.mxu0 0
    %256 = vmatpush1.bf16.msra.mxu0 0
    %257 = vmatprep.subr.bf16.mxu0 0
    %258 = vmatpush1.bf16.msra.mxu0 0
    %259 = vmatprep.subr.bf16.mxu0 0
    %260 = vmatpush1.bf16.msra.mxu0 0
    %261 = vmatprep.subr.bf16.mxu0 0
    %262 = vmatpush1.bf16.msra.mxu0 0
    %263 = vmatprep.subr.bf16.mxu0 0
    %264 = vmatpush1.bf16.msra.mxu0 0
    %265 = vmatprep.subr.bf16.mxu0 0
    %266 = vmatpush1.bf16.msra.mxu0 0
    %267 = vmatprep.subr.bf16.mxu0 0
    %268 = vmatpush1.bf16.msra.mxu0 0
    %269 = vmatprep.mubr.bf16.mxu0 0
    %270 = vmatmul.mubr.bf16.gmra.mrb[0].mxu0 %v235
    %v271 = vpop.f32.mrb[0].mxu0
    %v272 = vadd.f32 %v219, %v271
    %v273 = vpop.f32.mrb[0].mxu0
    %v274 = vpop.f32.mrb[0].mxu0
    %v275 = vpop.f32.mrb[0].mxu0
    %276 = vdwg.mxu0
    %v277 = vmax.f32 %v272, 0.0
    %v278 = vpack.c.bf16 %v277, %v277
    %v279 = vld [vmem:[%s7] sm:$0xf]
    %v280 = vld [vmem:[%s7 + $0x4] sm:$0xf]
    %v281 = vld [vmem:[%s7 + $0x8] sm:$0xf]
    %v282 = vld [vmem:[%s7 + $0xc] sm:$0xf]
    %v283 = vld [vmem:[%s8] sm:$0x1]
    %v285 = vlaneseq
    %v286 = vshrl.u32 %v285, 7
    %v287 = vsub.s32 0, %v286
    %v288 = vrot.slane %v283, %v287
    %v294 = vunpack.c.l.b16 %v279
    %v295 = vunpack.c.l.b16 %v280
    %v296 = vunpack.c.l.b16 %v281
    %v297 = vunpack.c.l.b16 %v282
    %v298 = vpack.c.b16 %v295, %v294
    %v299 = vpack.c.b16 %v297, %v296
    %v303 = vsel %vm233, %v278, 0
    %305 = vmatprep.subr.bf16.mxu0 0
    %306 = vmatpush1.bf16.msra.mxu0 %v298
    %307 = vmatprep.subr.bf16.mxu0 0
    %308 = vmatpush1.bf16.msra.mxu0 %v299
    %309 = vmatprep.subr.bf16.mxu0 0
    %310 = vmatpush1.bf16.msra.mxu0 0
    %311 = vmatprep.subr.bf16.mxu0 0
    %312 = vmatpush1.bf16.msra.mxu0 0
    %313 = vmatprep.subr.bf16.mxu0 0
    %314 = vmatpush1.bf16.msra.mxu0 0
    %315 = vmatprep.subr.bf16.mxu0 0
    %316 = vmatpush1.bf16.msra.mxu0 0
    %317 = vmatprep.subr.bf16.mxu0 0
    %318 = vmatpush1.bf16.msra.mxu0 0
    %319 = vmatprep.subr.bf16.mxu0 0
    %320 = vmatpush1.bf16.msra.mxu0 0
    %321 = vmatprep.subr.bf16.mxu0 0
    %322 = vmatpush1.bf16.msra.mxu0 0
    %323 = vmatprep.subr.bf16.mxu0 0
    %324 = vmatpush1.bf16.msra.mxu0 0
    %325 = vmatprep.subr.bf16.mxu0 0
    %326 = vmatpush1.bf16.msra.mxu0 0
    %327 = vmatprep.subr.bf16.mxu0 0
    %328 = vmatpush1.bf16.msra.mxu0 0
    %329 = vmatprep.subr.bf16.mxu0 0
    %330 = vmatpush1.bf16.msra.mxu0 0
    %331 = vmatprep.subr.bf16.mxu0 0
    %332 = vmatpush1.bf16.msra.mxu0 0
    %333 = vmatprep.subr.bf16.mxu0 0
    %334 = vmatpush1.bf16.msra.mxu0 0
    %335 = vmatprep.subr.bf16.mxu0 0
    %336 = vmatpush1.bf16.msra.mxu0 0
    %337 = vmatprep.mubr.bf16.mxu0 0
    %338 = vmatmul.mubr.bf16.gmra.mrb[0].mxu0 %v303
    %v339 = vpop.f32.mrb[0].mxu0
    %v340 = vadd.f32 %v288, %v339
    %v341 = vpop.f32.mrb[0].mxu0
    %v342 = vpop.f32.mrb[0].mxu0
    %v343 = vpop.f32.mrb[0].mxu0
    %344 = vdwg.mxu0
    %345 = vst [vmem:[#allocation11] sm:$0xff] %v340
    // Predicated region
    $region58: #{tpu_custom_call.1} parent=1 // pred_check
      _
    $region59: #{tpu_custom_call.1} parent=1 // pred_check_branch
      %347 = sbr.rel (0) target = $region61
    $region60: #{tpu_custom_call.1} parent=1 // pred_region
      %s349 = ssub.s32 128, 128
      %350 = vsyncadd [#allocation4], %s349
      %s352 = sshll.u32 [#allocation11], 4
      %s353 = int_to_ptr.vmem [resolvable:$true] %s352
      %355 = dma.vmem_to_hbm [thread:$0]  %s353, 128, %s9, [#allocation4]
    $region61: #{tpu_custom_call.1} parent=1 // pred_fallthru
      _
    // Predicated region
    $region62: #{tpu_custom_call.1} parent=1 // pred_check
      _
    $region63: #{tpu_custom_call.1} parent=1 // pred_check_branch
      %357 = sbr.rel (0) target = $region65
    $region64: #{tpu_custom_call.1} parent=1 // pred_region
      %358 = dma.done [#allocation4], 128
    $region65: #{tpu_custom_call.1} parent=1 // pred_fallthru
      _
    %359 = vsyncpa [#allocation3], 1
    %360 = vsyncpa [#allocation6], 1
    %361 = vsyncpa [#allocation9], 1
    %362 = vsyncpa [#allocation4], 1

</llo_original>
